<compile_context>
chip_gen: v7x
topology: tpu7x:2x2x1
jax: 0.10.0
libtpu: 0.0.40
codegen_flags: <defaults>
</compile_context>

<pallas_src>
import functools

import jax
import jax.numpy as jnp
from jax.experimental import pallas as pl
from jax.experimental.pallas import tpu as pltpu


def _round_up(a: int, m: int) -> int:
    return ((a + m - 1) // m) * m


def _pairwise_dist_kernel(xa_ref, yat_ref, p_ref):
    # xa_ref : (TM, K)  augmented x tile  [-2x | ||x||^2 | 1 | 0-pad]
    # yat_ref: (K, TN)  augmented y^T tile [  y ;    1   ; ||y||^2 ; 0-pad]
    # p_ref  : (TM, TN) output tile.  One MXU matmul yields
    #          ||x||^2 + ||y||^2 - 2<x,y> directly; no extra adds or DMAs.
    p_ref[...] = jnp.dot(
        xa_ref[...], yat_ref[...], preferred_element_type=jnp.float32
    ).astype(p_ref.dtype)


@functools.partial(jax.jit, static_argnames=("tm", "tn"))
def batch_pairwise_dist(x, y, *, tm: int = 1024, tn: int = 2048):
    """Pallas TPU equivalent of _Distance.batch_pairwise_dist.

    x: (B, Nx, D), y: (B, Ny, D)  ->  P: (B, Nx, Ny)
    """
    B, Nx, D = x.shape
    By, Ny, Dy = y.shape
    assert B == By and D == Dy

    out_dtype = x.dtype
    itemsize = jnp.dtype(out_dtype).itemsize
    sub = {4: 8, 2: 16, 1: 32}.get(itemsize, 8)

    # Adapt tile sizes to small inputs while keeping TPU alignment:
    #   TM multiple of the packed sublane tile, TN multiple of 128 (lane-dense
    #   stores for all interior tiles; only true edge tiles pay masked vst).
    tm = min(tm, _round_up(Nx, sub))
    tn = min(tn, _round_up(Ny, 128))

    # Augmented contraction dim: [-2x (D), ||x||^2, 1] padded to a multiple
    # of 8 so the (K, TN) y^T tile is sublane-aligned.  Zero columns are free.
    K = _round_up(D + 2, 8)
    pad_k = K - (D + 2)

    xf = x.astype(jnp.float32)
    yf = y.astype(jnp.float32)
    rx = jnp.sum(xf * xf, axis=-1, keepdims=True)            # (B, Nx, 1)
    ry = jnp.sum(yf * yf, axis=-1, keepdims=True)            # (B, Ny, 1)

    x_parts = [-2.0 * xf, rx, jnp.ones((B, Nx, 1), jnp.float32)]
    y_parts = [yf, jnp.ones((B, Ny, 1), jnp.float32), ry]
    if pad_k:
        x_parts.append(jnp.zeros((B, Nx, pad_k), jnp.float32))
        y_parts.append(jnp.zeros((B, Ny, pad_k), jnp.float32))
    x_aug = jnp.concatenate(x_parts, axis=-1)                # (B, Nx, K)
    y_aug_t = jnp.swapaxes(jnp.concatenate(y_parts, axis=-1), 1, 2)  # (B, K, Ny)

    grid = (B, pl.cdiv(Nx, tm), pl.cdiv(Ny, tn))

    grid_spec = pltpu.PrefetchScalarGridSpec(
        num_scalar_prefetch=0,
        grid=grid,
        in_specs=[
            # x_aug tile: constant in j -> stays VMEM-resident across the
            # whole Ny sweep (no re-DMA per output column tile).
            pl.BlockSpec((pl.Squeezed(), tm, K), lambda b, i, j: (b, i, 0)),
            pl.BlockSpec((pl.Squeezed(), K, tn), lambda b, i, j: (b, 0, j)),
        ],
        out_specs=pl.BlockSpec((pl.Squeezed(), tm, tn),
                               lambda b, i, j: (b, i, j)),
    )

    return pl.pallas_call(
        _pairwise_dist_kernel,
        out_shape=jax.ShapeDtypeStruct((B, Nx, Ny), out_dtype),
        grid_spec=grid_spec,
        compiler_params=pltpu.CompilerParams(
            # No reduction axis (K is not tiled) -> all axes independent; on
            # v7x this lets Mosaic shard the (B, i, j) space across both TCs.
            dimension_semantics=("parallel", "parallel", "parallel"),
            # Keep <= 32 MiB so double-buffering survives v7x's 64 MiB VMEM.
            vmem_limit_bytes=32 * 1024 * 1024,
        ),
    )(x_aug, y_aug_t)


def _reference(x, y):
    # Pure-JAX reference mirroring the torch code exactly.
    xx = jnp.einsum("bid,bjd->bij", x, x)
    yy = jnp.einsum("bid,bjd->bij", y, y)
    zz = jnp.einsum("bid,bjd->bij", x, y)
    rx = jnp.diagonal(xx, axis1=1, axis2=2)[:, :, None]   # (B, Nx, 1)
    ry = jnp.diagonal(yy, axis1=1, axis2=2)[:, None, :]   # (B, 1, Ny)
    return rx + ry - 2.0 * zz


if __name__ == "__main__":
    # _Distance has no learnable parameters; forward() is `pass` in the
    # reference module, so only batch_pairwise_dist is implemented.
    # TODO(synk): forward() is empty in the PyTorch spec; nothing to translate.
    key = jax.random.PRNGKey(0)
    kx, ky = jax.random.split(key)
    B, Nx, Ny, D = 2, 64, 48, 3
    x = jax.random.normal(kx, (B, Nx, D), dtype=jnp.float32)
    y = jax.random.normal(ky, (B, Ny, D), dtype=jnp.float32)

    P = jax.block_until_ready(batch_pairwise_dist(x, y))
    P_ref = _reference(x, y)

    assert P.shape == (B, Nx, Ny)
    assert jnp.allclose(P, P_ref, atol=5e-4, rtol=1e-4)
    print("KERNEL_OK")
</pallas_src>

<mosaic_0001>
module attributes {stable_mosaic.version = 11 : i64} {
  func.func @_pairwise_dist_kernel(%arg0: i32, %arg1: i32, %arg2: i32, %arg3: memref<1x64x8xf32, #tpu.memory_space<vmem>>, %arg4: memref<1x8x128xf32, #tpu.memory_space<vmem>>, %arg5: memref<1x64x128xf32, #tpu.memory_space<vmem>>) attributes {dimension_semantics = [#tpu.dimension_semantics<parallel>, #tpu.dimension_semantics<parallel>, #tpu.dimension_semantics<parallel>], iteration_bounds = array<i64: 2, 1, 1>, scalar_prefetch = 0 : i64, scratch_operands = 0 : i64, tpu.core_type = #tpu.core_type<tc>, window_params = [{transform_indices = @transform_0, window_bounds = array<i64: 1, 64, 8>}, {transform_indices = @transform_1, window_bounds = array<i64: 1, 8, 128>}, {transform_indices = @transform_2, window_bounds = array<i64: 1, 64, 128>}]} {
    %c0 = arith.constant 0 : index
    %c0_0 = arith.constant 0 : index
    %c0_1 = arith.constant 0 : index
    %0 = vector.load %arg3[%c0, %c0_0, %c0_1] : memref<1x64x8xf32, #tpu.memory_space<vmem>>, vector<1x64x8xf32>
    %1 = vector.shape_cast %0 : vector<1x64x8xf32> to vector<64x8xf32>
    %c0_2 = arith.constant 0 : index
    %c0_3 = arith.constant 0 : index
    %c0_4 = arith.constant 0 : index
    %2 = vector.load %arg4[%c0_2, %c0_3, %c0_4] : memref<1x8x128xf32, #tpu.memory_space<vmem>>, vector<1x8x128xf32>
    %3 = vector.shape_cast %2 : vector<1x8x128xf32> to vector<8x128xf32>
    %cst = arith.constant dense<0.000000e+00> : vector<64x128xf32>
    %4 = tpu.matmul %1, %3, %cst {dimension_numbers = #tpu.dot_dimension_numbers<[1], [0], [0], [1], [0, 0, 1, 1], [], []>} : vector<64x8xf32>, vector<8x128xf32>, vector<64x128xf32> -> vector<64x128xf32>
    %c0_5 = arith.constant 0 : index
    %c0_6 = arith.constant 0 : index
    %c0_7 = arith.constant 0 : index
    %5 = vector.load %arg5[%c0_5, %c0_6, %c0_7] : memref<1x64x128xf32, #tpu.memory_space<vmem>>, vector<1x64x128xf32>
    %6 = vector.shape_cast %5 : vector<1x64x128xf32> to vector<64x128xf32>
    %7 = vector.shape_cast %4 : vector<64x128xf32> to vector<1x64x128xf32>
    tpu.vector_store %arg5[%c0_5, %c0_6, %c0_7], %7 {strides = array<i32>} : memref<1x64x128xf32, #tpu.memory_space<vmem>>, vector<1x64x128xf32>,
    return
  }
  func.func @transform_0(%arg0: i32, %arg1: i32, %arg2: i32) -> (i32, i32, i32) {
    %c0_i32 = arith.constant 0 : i32
    %c0_i32_0 = arith.constant 0 : i32
    return %arg0, %arg1, %c0_i32 : i32, i32, i32
  }
  func.func @transform_1(%arg0: i32, %arg1: i32, %arg2: i32) -> (i32, i32, i32) {
    %c0_i32 = arith.constant 0 : i32
    %c0_i32_0 = arith.constant 0 : i32
    return %arg0, %c0_i32, %arg2 : i32, i32, i32
  }
  func.func @transform_2(%arg0: i32, %arg1: i32, %arg2: i32) -> (i32, i32, i32) {
    %c0_i32 = arith.constant 0 : i32
    return %arg0, %arg1, %arg2 : i32, i32, i32
  }
}

</mosaic_0001>

<llo_original>
// kernel: batch_pairwise_dist.1
$region0: #{batch_pairwise_dist.1}
  #allocation0 [shape = 'u32[]', space=smem, size = 0x4, offset = 0x4, fixed_abs, tag = 'smem constant byte address 0x4 - core index']
  #allocation1 [shape = 'u32[144,128]{1,0:T(1,128)}', space=vmem, size = 0x12000, scoped, tag = 'internal scratch']
  %s0 = inlined_call_operand.vmem [shape: f32[2,64,8], index: 0, kind: input, shape index: {}]
  %s1 = inlined_call_operand.vmem [shape: f32[2,8,48], index: 1, kind: input, shape index: {}]
  %s2 = inlined_call_operand.vmem [shape: f32[2,64,48], index: 2, kind: output, shape index: {}]
  %s3 = sld [smem:[#allocation0]]
  $region41: #{batch_pairwise_dist.1} parent=0
    _
  %s5 = ssub.s32 1, %s3
  %s6 = scalar_select 0, %s5, %s3
  loop: start=0, step=1, limit=4
  $region2: #{batch_pairwise_dist.1} parent=0 // loop_pre_header
    _
  $region3: #{batch_pairwise_dist.1} parent=0 // loop_header
    %s8 = sphi 0, %s12
    %p9 = scmp.ge.s32.totalorder %s8, 4
    %s15 = sphi 0, %s34
    %s16 = sphi 0, %s30
    %s17 = sphi 0, %s26
    %s18 = sphi 0, %s15
    %s19 = sphi 0, %s16
    %s20 = sphi 0, %s17
    %s21 = sphi 0, %s18
    %s22 = sphi 0, %s19
    %s23 = sphi 0, %s20
    %s39 = sphi 0, %s41
    %s42 = sphi 0, %s39
    %s43 = sphi 0, %s42
    %s59 = sphi 0, %s43
    %s67 = sphi 0, %s69
    %s70 = sphi 0, %s67
    %s71 = sphi 0, %s70
    %s87 = sphi 0, %s71
    %s97 = sphi 0, %s99
    %s100 = sphi 0, %s97
    %s101 = sphi 0, %s100
    %s117 = sphi 0, %s101
  $region4: #{batch_pairwise_dist.1} parent=0 // loop_header_branch
    %11 = sbr.rel (%p9) target = $region8
  $region5: #{batch_pairwise_dist.1} parent=0 // loop_body
    %s13 = ssub.s32 %s8, 1
    %s14 = ssub.s32 %s8, 2
    %s24 = sadd.s32 1, %s17
    %p25 = scmp.ge.s32.totalorder %s24, 1
    %s26 = scalar_select %p25, 0, %s24
    %s27 = sadd.s32 1, %s16
    %s28 = scalar_select %p25, %s27, %s16
    %p29 = scmp.ge.s32.totalorder %s28, 1
    %s30 = scalar_select %p29, 0, %s28
    %s31 = sadd.s32 1, %s15
    %s32 = scalar_select %p29, %s31, %s15
    %p33 = scmp.ge.s32.totalorder %s32, 2
    %s34 = scalar_select %p33, 0, %s32
    %s35 = ssub.s32 %s15, %s34
    %s36 = ssub.s32 %s16, %s30
    %s37 = sor.u32 %s35, %s36
    %p38 = scmp.eq.s32.totalorder %s37, 0
    %s40 = sadd.s32 %s39, 1
    %s41 = scalar_select %p38, %s39, %s40
    %p44 = pneg %p38
    %p45 = scmp.eq.s32.totalorder %s8, 1
    %p46 = por %p44, %p45
    %p47 = scmp.ne.s32.totalorder %s39, %s42
    %p48 = scmp.eq.s32.totalorder %s8, 0
    %p49 = por %p47, %p48
    %p50 = scmp.ne.s32.totalorder %s39, %s42
    %p51 = scmp.eq.s32.totalorder %s13, 1
    %p52 = por %p50, %p51
    %p53 = scmp.ne.s32.totalorder %s42, %s43
    %p54 = scmp.eq.s32.totalorder %s13, 0
    %p55 = por %p53, %p54
    %p56 = scmp.ne.s32.totalorder %s42, %s43
    %p57 = scmp.eq.s32.totalorder %s14, 1
    %p58 = por %p56, %p57
    %p60 = scmp.ne.s32.totalorder %s43, %s59
    %p61 = scmp.eq.s32.totalorder %s14, 0
    %p62 = por %p60, %p61
    %s63 = ssub.s32 %s15, %s34
    %s64 = ssub.s32 %s17, %s26
    %s65 = sor.u32 %s63, %s64
    %p66 = scmp.eq.s32.totalorder %s65, 0
    %s68 = sadd.s32 %s67, 1
    %s69 = scalar_select %p66, %s67, %s68
    %p72 = pneg %p66
    %p73 = scmp.eq.s32.totalorder %s8, 1
    %p74 = por %p72, %p73
    %p75 = scmp.ne.s32.totalorder %s67, %s70
    %p76 = scmp.eq.s32.totalorder %s8, 0
    %p77 = por %p75, %p76
    %p78 = scmp.ne.s32.totalorder %s67, %s70
    %p79 = scmp.eq.s32.totalorder %s13, 1
    %p80 = por %p78, %p79
    %p81 = scmp.ne.s32.totalorder %s70, %s71
    %p82 = scmp.eq.s32.totalorder %s13, 0
    %p83 = por %p81, %p82
    %p84 = scmp.ne.s32.totalorder %s70, %s71
    %p85 = scmp.eq.s32.totalorder %s14, 1
    %p86 = por %p84, %p85
    %p88 = scmp.ne.s32.totalorder %s71, %s87
    %p89 = scmp.eq.s32.totalorder %s14, 0
    %p90 = por %p88, %p89
    %s91 = ssub.s32 %s15, %s34
    %s92 = ssub.s32 %s16, %s30
    %s93 = sor.u32 %s91, %s92
    %s94 = ssub.s32 %s17, %s26
    %s95 = sor.u32 %s93, %s94
    %p96 = scmp.eq.s32.totalorder %s95, 0
    %s98 = sadd.s32 %s97, 1
    %s99 = scalar_select %p96, %s97, %s98
    %p102 = pneg %p96
    %p103 = scmp.eq.s32.totalorder %s8, 1
    %p104 = por %p102, %p103
    %p105 = scmp.ne.s32.totalorder %s97, %s100
    %p106 = scmp.eq.s32.totalorder %s8, 0
    %p107 = por %p105, %p106
    %p108 = scmp.ne.s32.totalorder %s97, %s100
    %p109 = scmp.eq.s32.totalorder %s13, 1
    %p110 = por %p108, %p109
    %p111 = scmp.ne.s32.totalorder %s100, %s101
    %p112 = scmp.eq.s32.totalorder %s13, 0
    %p113 = por %p111, %p112
    %p114 = scmp.ne.s32.totalorder %s100, %s101
    %p115 = scmp.eq.s32.totalorder %s14, 1
    %p116 = por %p114, %p115
    %p118 = scmp.ne.s32.totalorder %s101, %s117
    %p119 = scmp.eq.s32.totalorder %s14, 0
    %p120 = por %p118, %p119
    %p121 = scmp.le.s32.totalorder 1, %s8
    %p122 = scmp.lt.s32.totalorder %s8, 3
    %p123 = pnand %p121, %p122
    %p124 = pneg %p123
    // Predicated region
    $region9: #{batch_pairwise_dist.1} parent=5 // pred_check
      _
    $region10: #{batch_pairwise_dist.1} parent=5 // pred_check_branch
      %126 = sbr.rel (%p123) target = $region12
    $region11: #{batch_pairwise_dist.1} parent=5 // pred_region
      %s127 = ssub.s32 %s8, 1
    $region12: #{batch_pairwise_dist.1} parent=5 // pred_fallthru
      _
    %p128 = scmp.lt.s32.totalorder %s8, 2
    // Predicated region
    $region13: #{batch_pairwise_dist.1} parent=5 // pred_check
      %p129 = pneg %p128
    $region14: #{batch_pairwise_dist.1} parent=5 // pred_check_branch
      %131 = sbr.rel (%p129) target = $region16
    $region15: #{batch_pairwise_dist.1} parent=5 // pred_region
      // Predicated region
      $region17: #{batch_pairwise_dist.1} parent=15 // pred_check
        %p132 = pneg %p49
      $region18: #{batch_pairwise_dist.1} parent=15 // pred_check_branch
        %134 = sbr.rel (%p132) target = $region20
      $region19: #{batch_pairwise_dist.1} parent=15 // pred_region
        %s135 = smul.u32 8, %s16
        %p136 = scmp.lt.s32.totalorder %s15, 1
        %s137 = scalar_select %p136, %s15, 1
        %p138 = scmp.lt.s32.totalorder %s135, 7
        %s139 = scalar_select %p138, %s135, 7
        %s140 = smul.addr %s137, 8
        %s141 = sadd.s32 %s139, %s140
        %s142 = smul.addr %s141, 8
        %s143 = scalar_lea.vmem %s0, %s142
        %s144 = smul.u32 8, %s16
      $region20: #{batch_pairwise_dist.1} parent=15 // pred_fallthru
        _
      // Predicated region
      $region21: #{batch_pairwise_dist.1} parent=15 // pred_check
        %p145 = pneg %p77
      $region22: #{batch_pairwise_dist.1} parent=15 // pred_check_branch
        %147 = sbr.rel (%p145) target = $region24
      $region23: #{batch_pairwise_dist.1} parent=15 // pred_region
        %p148 = scmp.lt.s32.totalorder %s15, 1
        %s149 = scalar_select %p148, %s15, 1
        %p150 = scmp.lt.s32.totalorder %s17, 0
        %s151 = scalar_select %p150, %s17, 0
        %s152 = sadd.s32 %s151, %s149
        %s153 = smul.addr %s152, 8
        %s154 = scalar_lea.vmem %s1, %s153
      $region24: #{batch_pairwise_dist.1} parent=15 // pred_fallthru
        _
    $region16: #{batch_pairwise_dist.1} parent=5 // pred_fallthru
      _
    %p155 = scmp.le.s32.totalorder 1, %s8
    %p156 = scmp.lt.s32.totalorder %s8, 3
    %p157 = pnand %p155, %p156
    %p158 = pneg %p157
    // Predicated region
    $region25: #{batch_pairwise_dist.1} parent=5 // pred_check
      _
    $region26: #{batch_pairwise_dist.1} parent=5 // pred_check_branch
      %160 = sbr.rel (%p157) target = $region28
    $region27: #{batch_pairwise_dist.1} parent=5 // pred_region
      %s161 = ssub.s32 %s8, 1
      %s162 = smul.u32 8, %s19
      %p163 = scmp.lt.s32.totalorder %s18, 1
      %s164 = scalar_select %p163, %s18, 1
      %p165 = scmp.lt.s32.totalorder %s162, 7
      %s166 = scalar_select %p165, %s162, 7
      %s167 = smul.addr %s164, 8
      %s168 = sadd.s32 %s166, %s167
      %s169 = smul.addr %s168, 8
      %s170 = scalar_lea.vmem %s0, %s169
      %p171 = pneg %p55
      %p172 = pneg %p52
      %p173 = scmp.lt.s32.totalorder %s18, 1
      %s174 = scalar_select %p173, %s18, 1
      %p175 = scmp.lt.s32.totalorder %s20, 0
      %s176 = scalar_select %p175, %s20, 0
      %s177 = sadd.s32 %s176, %s174
      %s178 = smul.addr %s177, 8
      %s179 = scalar_lea.vmem %s1, %s178
      %p180 = pneg %p83
      %p181 = pneg %p80
      %p182 = pneg %p113
      %p183 = pneg %p110
      %s184 = smul.u32 8, %s19
      %p185 = scmp.lt.s32.totalorder %s18, 1
      %s186 = scalar_select %p185, %s18, 1
      %p187 = scmp.lt.s32.totalorder %s184, 7
      %s188 = scalar_select %p187, %s184, 7
      %p189 = scmp.lt.s32.totalorder %s20, 0
      %s190 = scalar_select %p189, %s20, 0
      %s191 = sadd.s32 %s190, %s188
      %s192 = smul.addr %s186, 8
      %s193 = sadd.s32 %s191, %s192
      %s194 = smul.addr %s193, 8
      %s195 = scalar_lea.vmem %s2, %s194
      %s196 = smul.u32 8, %s19
      %p197 = scmp.lt.s32.totalorder %s18, 1
      %s198 = scalar_select %p197, %s18, 1
      %p199 = scmp.lt.s32.totalorder %s196, 7
      %s200 = scalar_select %p199, %s196, 7
      %s201 = smul.addr %s198, 8
      %s202 = sadd.s32 %s200, %s201
      %s203 = smul.addr %s202, 8
      %s204 = scalar_lea.vmem %s0, %s203
      %s205 = smul.u32 8, %s19
      %p206 = scmp.lt.s32.totalorder %s18, 1
      %s207 = scalar_select %p206, %s18, 1
      %p208 = scmp.lt.s32.totalorder %s20, 0
      %s209 = scalar_select %p208, %s20, 0
      %s210 = sadd.s32 %s209, %s207
      %s211 = smul.addr %s210, 8
      %s212 = scalar_lea.vmem %s1, %s211
      %s213 = smul.u32 8, %s19
      %p214 = scmp.lt.s32.totalorder %s18, 1
      %s215 = scalar_select %p214, %s18, 1
      %p216 = scmp.lt.s32.totalorder %s213, 7
      %s217 = scalar_select %p216, %s213, 7
      %p218 = scmp.lt.s32.totalorder %s20, 0
      %s219 = scalar_select %p218, %s20, 0
      %s220 = sadd.s32 %s219, %s217
      %s221 = smul.addr %s215, 8
      %s222 = sadd.s32 %s220, %s221
      %s223 = smul.addr %s222, 8
      %s224 = scalar_lea.vmem %s2, %s223
      %s225 = smul.u32 8, %s19
      %v226 = vld [vmem:[%s204] sm:$0xff]
      %v227 = vld [vmem:[%s204 + $0x8] sm:$0xff]
      %v228 = vld [vmem:[%s204 + $0x10] sm:$0xff]
      %v229 = vld [vmem:[%s204 + $0x18] sm:$0xff]
      %v230 = vld [vmem:[%s204 + $0x20] sm:$0xff]
      %v231 = vld [vmem:[%s204 + $0x28] sm:$0xff]
      %v232 = vld [vmem:[%s204 + $0x30] sm:$0xff]
      %v233 = vld [vmem:[%s204 + $0x38] sm:$0xff]
      %v234 = vld [vmem:[%s212] sm:$0xff]
      %vm235 = vcmask 64512
      %v237 = vsel %vm235, %v226, 0
      %v240 = vsel %vm235, %v227, 0
      %v243 = vsel %vm235, %v228, 0
      %v246 = vsel %vm235, %v229, 0
      %v249 = vsel %vm235, %v230, 0
      %v252 = vsel %vm235, %v231, 0
      %v255 = vsel %vm235, %v232, 0
      %v258 = vsel %vm235, %v233, 0
      %260 = vmatprep.subr.mxu0 0.0
      %261 = vmatpush1.msra.mxu0 %v234
      %262 = vmatprep.subr.mxu0 0.0
      %263 = vmatpush1.msra.mxu0 0.0
      %264 = vmatprep.subr.mxu0 0.0
      %265 = vmatpush1.msra.mxu0 0.0
      %266 = vmatprep.subr.mxu0 0.0
      %267 = vmatpush1.msra.mxu0 0.0
      %268 = vmatprep.subr.mxu0 0.0
      %269 = vmatpush1.msra.mxu0 0.0
      %270 = vmatprep.subr.mxu0 0.0
      %271 = vmatpush1.msra.mxu0 0.0
      %272 = vmatprep.subr.mxu0 0.0
      %273 = vmatpush1.msra.mxu0 0.0
      %274 = vmatprep.subr.mxu0 0.0
      %275 = vmatpush1.msra.mxu0 0.0
      %276 = vmatprep.subr.mxu0 0.0
      %277 = vmatpush1.msra.mxu0 0.0
      %278 = vmatprep.subr.mxu0 0.0
      %279 = vmatpush1.msra.mxu0 0.0
      %280 = vmatprep.subr.mxu0 0.0
      %281 = vmatpush1.msra.mxu0 0.0
      %282 = vmatprep.subr.mxu0 0.0
      %283 = vmatpush1.msra.mxu0 0.0
      %284 = vmatprep.subr.mxu0 0.0
      %285 = vmatpush1.msra.mxu0 0.0
      %286 = vmatprep.subr.mxu0 0.0
      %287 = vmatpush1.msra.mxu0 0.0
      %288 = vmatprep.subr.mxu0 0.0
      %289 = vmatpush1.msra.mxu0 0.0
      %290 = vmatprep.subr.mxu0 0.0
      %291 = vmatpush1.msra.mxu0 0.0
      %292 = vmatprep.subr.mxu0 0.0
      %293 = vmatpush1.msra.mxu0 0.0
      %294 = vmatprep.subr.mxu0 0.0
      %295 = vmatpush1.msra.mxu0 0.0
      %296 = vmatprep.subr.mxu0 0.0
      %297 = vmatpush1.msra.mxu0 0.0
      %298 = vmatprep.subr.mxu0 0.0
      %299 = vmatpush1.msra.mxu0 0.0
      %300 = vmatprep.subr.mxu0 0.0
      %301 = vmatpush1.msra.mxu0 0.0
      %302 = vmatprep.subr.mxu0 0.0
      %303 = vmatpush1.msra.mxu0 0.0
      %304 = vmatprep.subr.mxu0 0.0
      %305 = vmatpush1.msra.mxu0 0.0
      %306 = vmatprep.subr.mxu0 0.0
      %307 = vmatpush1.msra.mxu0 0.0
      %308 = vmatprep.subr.mxu0 0.0
      %309 = vmatpush1.msra.mxu0 0.0
      %310 = vmatprep.subr.mxu0 0.0
      %311 = vmatpush1.msra.mxu0 0.0
      %312 = vmatprep.subr.mxu0 0.0
      %313 = vmatpush1.msra.mxu0 0.0
      %314 = vmatprep.subr.mxu0 0.0
      %315 = vmatpush1.msra.mxu0 0.0
      %316 = vmatprep.subr.mxu0 0.0
      %317 = vmatpush1.msra.mxu0 0.0
      %318 = vmatprep.subr.mxu0 0.0
      %319 = vmatpush1.msra.mxu0 0.0
      %320 = vmatprep.subr.mxu0 0.0
      %321 = vmatpush1.msra.mxu0 0.0
      %322 = vmatprep.subr.mxu0 0.0
      %323 = vmatpush1.msra.mxu0 0.0
      %324 = vmatprep.mubr.f32.mxu0 0.0
      %325 = vmatmul.mubr.f32.gmra.mrb[0].mxu0 %v237
      %v326 = vpop.f32.mrb[0].mxu0
      %v327 = vadd.f32 0.0, %v326
      %v328 = vpop.f32.mrb[0].mxu0
      %329 = vmatprep.mubr.f32.mxu0 0.0
      %330 = vmatmul.mubr.f32.gmra.mrb[0].mxu0 %v240
      %v331 = vpop.f32.mrb[0].mxu0
      %v332 = vadd.f32 0.0, %v331
      %v333 = vpop.f32.mrb[0].mxu0
      %334 = vmatprep.mubr.f32.mxu0 0.0
      %335 = vmatmul.mubr.f32.gmra.mrb[0].mxu0 %v243
      %v336 = vpop.f32.mrb[0].mxu0
      %v337 = vadd.f32 0.0, %v336
      %v338 = vpop.f32.mrb[0].mxu0
      %339 = vmatprep.mubr.f32.mxu0 0.0
      %340 = vmatmul.mubr.f32.gmra.mrb[0].mxu0 %v246
      %v341 = vpop.f32.mrb[0].mxu0
      %v342 = vadd.f32 0.0, %v341
      %v343 = vpop.f32.mrb[0].mxu0
      %344 = vmatprep.mubr.f32.mxu0 0.0
      %345 = vmatmul.mubr.f32.gmra.mrb[0].mxu0 %v249
      %v346 = vpop.f32.mrb[0].mxu0
      %v347 = vadd.f32 0.0, %v346
      %v348 = vpop.f32.mrb[0].mxu0
      %349 = vmatprep.mubr.f32.mxu0 0.0
      %350 = vmatmul.mubr.f32.gmra.mrb[0].mxu0 %v252
      %v351 = vpop.f32.mrb[0].mxu0
      %v352 = vadd.f32 0.0, %v351
      %v353 = vpop.f32.mrb[0].mxu0
      %354 = vmatprep.mubr.f32.mxu0 0.0
      %355 = vmatmul.mubr.f32.gmra.mrb[0].mxu0 %v255
      %v356 = vpop.f32.mrb[0].mxu0
      %v357 = vadd.f32 0.0, %v356
      %v358 = vpop.f32.mrb[0].mxu0
      %359 = vmatprep.mubr.f32.mxu0 0.0
      %360 = vmatmul.mubr.f32.gmra.mrb[0].mxu0 %v258
      %v361 = vpop.f32.mrb[0].mxu0
      %v362 = vadd.f32 0.0, %v361
      %v363 = vpop.f32.mrb[0].mxu0
      %364 = vdwg.mxu0
      %365 = vst [vmem:[%s224] sm:$0xff] %v327
      %366 = vst [vmem:[%s224 + $0x8] sm:$0xff] %v332
      %367 = vst [vmem:[%s224 + $0x10] sm:$0xff] %v337
      %368 = vst [vmem:[%s224 + $0x18] sm:$0xff] %v342
      %369 = vst [vmem:[%s224 + $0x20] sm:$0xff] %v347
      %370 = vst [vmem:[%s224 + $0x28] sm:$0xff] %v352
      %371 = vst [vmem:[%s224 + $0x30] sm:$0xff] %v357
      %372 = vst [vmem:[%s224 + $0x38] sm:$0xff] %v362
      %s373 = smul.u32 8, %s19
      %p374 = scmp.lt.s32.totalorder %s18, 1
      %s375 = scalar_select %p374, %s18, 1
      %p376 = scmp.lt.s32.totalorder %s373, 7
      %s377 = scalar_select %p376, %s373, 7
      %p378 = scmp.lt.s32.totalorder %s20, 0
      %s379 = scalar_select %p378, %s20, 0
      %s380 = sadd.s32 %s379, %s377
      %s381 = smul.addr %s375, 8
      %s382 = sadd.s32 %s380, %s381
      %s383 = smul.addr %s382, 8
      %s384 = scalar_lea.vmem %s2, %s383
      // Predicated region
      $region29: #{batch_pairwise_dist.1} parent=27 // pred_check
        %p385 = pneg %p110
      $region30: #{batch_pairwise_dist.1} parent=27 // pred_check_branch
        %387 = sbr.rel (%p385) target = $region32
      $region31: #{batch_pairwise_dist.1} parent=27 // pred_region
        %s388 = smul.u32 8, %s19
      $region32: #{batch_pairwise_dist.1} parent=27 // pred_fallthru
        _
    $region28: #{batch_pairwise_dist.1} parent=5 // pred_fallthru
      _
    %p389 = scmp.le.s32.totalorder 2, %s8
    // Predicated region
    $region33: #{batch_pairwise_dist.1} parent=5 // pred_check
      %p390 = pneg %p389
    $region34: #{batch_pairwise_dist.1} parent=5 // pred_check_branch
      %392 = sbr.rel (%p390) target = $region36
    $region35: #{batch_pairwise_dist.1} parent=5 // pred_region
      %s393 = ssub.s32 %s8, 2
      // Predicated region
      $region37: #{batch_pairwise_dist.1} parent=35 // pred_check
        %p394 = pneg %p116
      $region38: #{batch_pairwise_dist.1} parent=35 // pred_check_branch
        %396 = sbr.rel (%p394) target = $region40
      $region39: #{batch_pairwise_dist.1} parent=35 // pred_region
        %s397 = smul.u32 8, %s22
        %p398 = scmp.lt.s32.totalorder %s21, 1
        %s399 = scalar_select %p398, %s21, 1
        %p400 = scmp.lt.s32.totalorder %s397, 7
        %s401 = scalar_select %p400, %s397, 7
        %p402 = scmp.lt.s32.totalorder %s23, 0
        %s403 = scalar_select %p402, %s23, 0
        %s404 = sadd.s32 %s403, %s401
        %s405 = smul.addr %s399, 8
        %s406 = sadd.s32 %s404, %s405
        %s407 = smul.addr %s406, 8
        %s408 = scalar_lea.vmem %s2, %s407
      $region40: #{batch_pairwise_dist.1} parent=35 // pred_fallthru
        _
    $region36: #{batch_pairwise_dist.1} parent=5 // pred_fallthru
      _
  $region6: #{batch_pairwise_dist.1} parent=0 // loop_footer
    %s12 = sadd.s32 1, %s8
  $region7: #{batch_pairwise_dist.1} parent=0 // loop_footer_branch
    %7 = sbr.rel target = $region3
  $region8: #{batch_pairwise_dist.1} parent=0 // loop_exit
    _

</llo_original>
